<compile_context>
chip_gen: v7x
topology: tpu7x:2x2x1
jax: 0.10.0
libtpu: 0.0.40
codegen_flags: <defaults>
</compile_context>

<pallas_src>
import functools
import math

import jax
import jax.numpy as jnp
from jax.experimental import pallas as pl
from jax.experimental.pallas import tpu as pltpu

LANES = 128
TARGET_TILE_ROWS = 2048  # 2048*128 f32 = 1 MiB per input per buffer


def _mix_loss_kernel(x_ref, t_ref, w_ref, acc_ref, *,
                     smoothing, use_dice, use_bce, use_ss, use_mask,
                     rows_total, tile_rows):
    ct = pl.program_id(1)

    @pl.when(ct == 0)
    def _():
        acc_ref[...] = jnp.zeros_like(acc_ref)

    x = x_ref[0].astype(jnp.float32)   # (tile_rows, 128)
    t = t_ref[0].astype(jnp.float32)
    w = w_ref[0].astype(jnp.float32)

    # Mask the ragged tail tile (only emitted when needed; static check).
    if rows_total % tile_rows != 0:
        row = jax.lax.broadcasted_iota(jnp.int32, (tile_rows, LANES), 0)
        valid = (row + ct * tile_rows) < rows_total
        x = jnp.where(valid, x, 0.0)
        t = jnp.where(valid, t, 0.0)
        w = jnp.where(valid, w, 0.0)

    xw = x * w
    quants = []
    if use_dice:
        quants += [xw * t, xw, t * w]
    if use_bce:
        ts = t * (1.0 - smoothing) + 0.5 * smoothing
        log_x = jnp.maximum(jnp.log(x), -100.0)       # nn.BCELoss log clamp
        log_1mx = jnp.maximum(jnp.log(1.0 - x), -100.0)
        elem = -(ts * (log_x - log_1mx) + log_1mx)    # folded BCE algebra
        quants += [w * elem, w]
    if use_ss:
        d2 = (xw - t) * (xw - t)
        bgw = (1.0 - t) * w
        quants += [d2 * t, t, d2 * bgw, bgw]
    if use_mask:
        quants += [x * (1.0 - w)]

    # Fold the tile's rows into vreg-shaped partial sums using only VPU adds;
    # the cross-lane/sublane reduce happens once, in the wrapper.
    for i, q in enumerate(quants):
        if tile_rows % 8 == 0:
            part = q.reshape(tile_rows // 8, 8, LANES).sum(axis=0)   # (8, 128)
        else:
            part = jnp.sum(q, axis=0, keepdims=True)                 # (1, 128)
        acc_ref[0, i] += part


def mix_loss(inputs, targets, weights, *,
             bdice_weight=1.0, bce_weight=0.0, sbce_weight=0.0,
             ss_weight=0.0, mask_weight=1.0,
             bce_smoothing=0.2, ss_alpha_sen=0.5,
             tile_rows=TARGET_TILE_ROWS):
    """Fused Pallas implementation of MixLoss.forward. Returns a dict of losses."""
    assert 0 <= bce_smoothing < 1
    assert inputs.shape == targets.shape == weights.shape
    if sbce_weight > 0:
        # TODO(synk): SamplingBCELoss needs a full-row softmax normalization plus
        # RNG-based negative sampling (two passes + rand_like); not implemented here.
        raise NotImplementedError("SamplingBCELoss path not implemented")

    use_dice = bdice_weight > 0
    use_bce = bce_weight > 0
    use_ss = ss_weight > 0
    use_mask = mask_weight > 0

    slots = []
    if use_dice:
        slots += ["dice_inter", "dice_xw", "dice_tw"]
    if use_bce:
        slots += ["bce_num", "bce_den"]
    if use_ss:
        slots += ["ss_sen", "ss_t", "ss_spec", "ss_bgw"]
    if use_mask:
        slots += ["mask_num"]
    q_count = len(slots)
    if q_count == 0:
        return {}

    n_batch = inputs.shape[0]
    m = math.prod(inputs.shape[1:])

    x = inputs.reshape(n_batch, m)      # native dtype kept end-to-end (no astype copy)
    t = targets.reshape(n_batch, m)
    w = weights.reshape(n_batch, m)

    if m % LANES != 0:
        # Rare fallback: per-sample size not lane aligned -> minimal zero pad
        # (zeros contribute nothing to any of the reductions).
        pad = LANES - (m % LANES)
        x = jnp.pad(x, ((0, 0), (0, pad)))
        t = jnp.pad(t, ((0, 0), (0, pad)))
        w = jnp.pad(w, ((0, 0), (0, pad)))

    rows = x.shape[1] // LANES
    x = x.reshape(n_batch, rows, LANES)
    t = t.reshape(n_batch, rows, LANES)
    w = w.reshape(n_batch, rows, LANES)

    tr = tile_rows if rows >= tile_rows else rows   # tile_rows is a multiple of 8
    col_tiles = pl.cdiv(rows, tr)
    acc_rows = 8 if tr % 8 == 0 else 1

    kernel = functools.partial(
        _mix_loss_kernel,
        smoothing=float(bce_smoothing),
        use_dice=use_dice, use_bce=use_bce, use_ss=use_ss, use_mask=use_mask,
        rows_total=rows, tile_rows=tr)

    data_spec = pl.BlockSpec((1, tr, LANES), lambda n, c: (n, c, 0))
    acc_spec = pl.BlockSpec((1, q_count, acc_rows, LANES), lambda n, c: (n, 0, 0, 0))

    acc = pl.pallas_call(
        kernel,
        out_shape=jax.ShapeDtypeStruct((n_batch, q_count, acc_rows, LANES), jnp.float32),
        grid_spec=pltpu.PrefetchScalarGridSpec(
            num_scalar_prefetch=0,
            grid=(n_batch, col_tiles),
            in_specs=[data_spec, data_spec, data_spec],
            out_specs=acc_spec,
        ),
        compiler_params=pltpu.CompilerParams(
            dimension_semantics=("parallel", "arbitrary")),
    )(x, t, w)

    sums = acc.sum(axis=(2, 3))            # (N, Q) — tiny final reduce
    idx = {name: i for i, name in enumerate(slots)}
    out_dtype = inputs.dtype
    losses = {}
    if use_dice:
        smooth = 1e-5
        inter = sums[:, idx["dice_inter"]]
        eff = (2.0 * inter + smooth) / (
            sums[:, idx["dice_xw"]] + sums[:, idx["dice_tw"]] + smooth)
        losses["BDiceLoss"] = (bdice_weight * (1.0 - jnp.sum(eff) / n_batch)).astype(out_dtype)
    if use_bce:
        losses["BCELoss"] = (bce_weight * sums[:, idx["bce_num"]].sum()
                             / sums[:, idx["bce_den"]].sum()).astype(out_dtype)
    if use_ss:
        smooth = 1e-5
        sen = sums[:, idx["ss_sen"]].sum() / (sums[:, idx["ss_t"]].sum() + smooth)
        spec = sums[:, idx["ss_spec"]].sum() / (sums[:, idx["ss_bgw"]].sum() + smooth)
        losses["SSLoss"] = (ss_weight * (ss_alpha_sen * sen
                                         + (1.0 - ss_alpha_sen) * spec)).astype(out_dtype)
    if use_mask:
        losses["MaskLoss"] = (mask_weight * sums[:, idx["mask_num"]].sum()
                              / (n_batch * m)).astype(out_dtype)
    return losses


def _ref_mix_loss(inputs, targets, weights, *,
                  bdice_weight=1.0, bce_weight=0.0, ss_weight=0.0,
                  mask_weight=1.0, bce_smoothing=0.2, ss_alpha_sen=0.5):
    """Pure-JAX reference mirroring the PyTorch MixLoss."""
    n = inputs.shape[0]
    x = inputs.reshape(n, -1).astype(jnp.float32)
    t = targets.reshape(n, -1).astype(jnp.float32)
    w = weights.reshape(n, -1).astype(jnp.float32)
    out = {}
    if bdice_weight > 0:
        smooth = 1e-5
        inter = jnp.sum(x * t * w, axis=1)
        eff = (2.0 * inter + smooth) / (jnp.sum(x * w, axis=1)
                                        + jnp.sum(t * w, axis=1) + smooth)
        out["BDiceLoss"] = bdice_weight * (1.0 - jnp.sum(eff) / n)
    if bce_weight > 0:
        s = bce_smoothing
        ts = t * (1.0 - s) + 0.5 * s
        lx = jnp.maximum(jnp.log(x), -100.0)
        l1 = jnp.maximum(jnp.log(1.0 - x), -100.0)
        loss = -(ts * lx + (1.0 - ts) * l1)
        out["BCELoss"] = bce_weight * jnp.sum(w * loss) / jnp.sum(w)
    if ss_weight > 0:
        smooth = 1e-5
        xw = x * w
        d2 = (xw - t) ** 2
        bg = (1.0 - t) * w
        sen = jnp.sum(d2 * t) / (jnp.sum(t) + smooth)
        spec = jnp.sum(d2 * bg) / (jnp.sum(bg) + smooth)
        out["SSLoss"] = ss_weight * (ss_alpha_sen * sen + (1.0 - ss_alpha_sen) * spec)
    if mask_weight > 0:
        out["MaskLoss"] = mask_weight * jnp.mean(
            inputs.astype(jnp.float32) * (1.0 - weights.astype(jnp.float32)))
    return out


if __name__ == "__main__":
    key = jax.random.PRNGKey(0)
    k1, k2, k3 = jax.random.split(key, 3)

    shape = (2, 4, 16, 16)   # NCHW probabilities / binary targets / weights
    inputs = jax.nn.sigmoid(jax.random.normal(k1, shape, jnp.float32))
    targets = (jax.random.uniform(k2, shape) > 0.5).astype(jnp.float32)
    weights = jax.random.uniform(k3, shape, jnp.float32) + 0.1

    # 1) Default MixLoss config: BinaryDiceLoss + MaskLoss.
    out = jax.block_until_ready(mix_loss(inputs, targets, weights))
    ref = _ref_mix_loss(inputs, targets, weights)
    assert set(out.keys()) == set(ref.keys()), (out.keys(), ref.keys())
    for name in ref:
        assert jnp.allclose(out[name], ref[name], rtol=1e-5, atol=1e-5), \
            (name, out[name], ref[name])

    # 2) Config that also exercises the BCE(smoothing=0.2) and
    #    Sensitivity/Specificity(alpha=0.5) kernel paths.
    cfg = dict(bdice_weight=1.0, bce_weight=0.5, ss_weight=0.25, mask_weight=1.0)
    out2 = jax.block_until_ready(mix_loss(inputs, targets, weights, **cfg))
    ref2 = _ref_mix_loss(inputs, targets, weights, **cfg)
    assert set(out2.keys()) == set(ref2.keys()), (out2.keys(), ref2.keys())
    for name in ref2:
        assert jnp.allclose(out2[name], ref2[name], rtol=1e-5, atol=1e-5), \
            (name, out2[name], ref2[name])

    print("KERNEL_OK")
</pallas_src>

<mosaic_0001>
module attributes {stable_mosaic.version = 11 : i64} {
  func.func @_mix_loss_kernel(%arg0: i32, %arg1: i32, %arg2: memref<1x8x128xf32, #tpu.memory_space<vmem>>, %arg3: memref<1x8x128xf32, #tpu.memory_space<vmem>>, %arg4: memref<1x8x128xf32, #tpu.memory_space<vmem>>, %arg5: memref<1x4x8x128xf32, #tpu.memory_space<vmem>>) attributes {dimension_semantics = [#tpu.dimension_semantics<parallel>, #tpu.dimension_semantics<arbitrary>], iteration_bounds = array<i64: 2, 1>, scalar_prefetch = 0 : i64, scratch_operands = 0 : i64, tpu.core_type = #tpu.core_type<tc>, window_params = [{transform_indices = @transform_0, window_bounds = array<i64: 1, 8, 128>}, {transform_indices = @transform_1, window_bounds = array<i64: 1, 8, 128>}, {transform_indices = @transform_2, window_bounds = array<i64: 1, 8, 128>}, {transform_indices = @transform_3, window_bounds = array<i64: 1, 4, 8, 128>}]} {
    %c0_i32 = arith.constant 0 : i32
    %0 = arith.cmpi eq, %arg1, %c0_i32 : i32
    %1 = arith.extui %0 : i1 to i32
    %c0_i32_0 = arith.constant 0 : i32
    %2 = arith.cmpi ne, %1, %c0_i32_0 : i32
    scf.if %2 {
      %cst_42 = arith.constant 0.000000e+00 : f32
      %47 = vector.broadcast %cst_42 : f32 to vector<1x4x8x128xf32>
      %c0_43 = arith.constant 0 : index
      %c0_44 = arith.constant 0 : index
      %c0_45 = arith.constant 0 : index
      %c0_46 = arith.constant 0 : index
      %48 = vector.load %arg5[%c0_43, %c0_44, %c0_45, %c0_46] : memref<1x4x8x128xf32, #tpu.memory_space<vmem>>, vector<1x4x8x128xf32>
      tpu.vector_store %arg5[%c0_43, %c0_44, %c0_45, %c0_46], %47 {strides = array<i32>} : memref<1x4x8x128xf32, #tpu.memory_space<vmem>>, vector<1x4x8x128xf32>,
    } else {
    }
    %c0 = arith.constant 0 : index
    %c0_1 = arith.constant 0 : index
    %c0_2 = arith.constant 0 : index
    %3 = vector.load %arg2[%c0, %c0_1, %c0_2] : memref<1x8x128xf32, #tpu.memory_space<vmem>>, vector<1x8x128xf32>
    %4 = vector.shape_cast %3 : vector<1x8x128xf32> to vector<8x128xf32>
    %c0_3 = arith.constant 0 : index
    %c0_4 = arith.constant 0 : index
    %c0_5 = arith.constant 0 : index
    %5 = vector.load %arg3[%c0_3, %c0_4, %c0_5] : memref<1x8x128xf32, #tpu.memory_space<vmem>>, vector<1x8x128xf32>
    %6 = vector.shape_cast %5 : vector<1x8x128xf32> to vector<8x128xf32>
    %c0_6 = arith.constant 0 : index
    %c0_7 = arith.constant 0 : index
    %c0_8 = arith.constant 0 : index
    %7 = vector.load %arg4[%c0_6, %c0_7, %c0_8] : memref<1x8x128xf32, #tpu.memory_space<vmem>>, vector<1x8x128xf32>
    %8 = vector.shape_cast %7 : vector<1x8x128xf32> to vector<8x128xf32>
    %9 = arith.mulf %4, %8 : vector<8x128xf32>
    %10 = arith.mulf %9, %6 : vector<8x128xf32>
    %11 = arith.mulf %6, %8 : vector<8x128xf32>
    %cst = arith.constant 1.000000e+00 : f32
    %12 = vector.broadcast %cst : f32 to vector<8x128xf32>
    %13 = arith.subf %12, %8 : vector<8x128xf32>
    %14 = arith.mulf %4, %13 : vector<8x128xf32>
    %15 = vector.shape_cast %10 : vector<8x128xf32> to vector<1x8x128xf32>
    %cst_9 = arith.constant dense<0.000000e+00> : vector<8x128xf32>
    %16 = vector.multi_reduction <add>, %15, %cst_9 [0] : vector<1x8x128xf32> to vector<8x128xf32>
    %c0_10 = arith.constant 0 : index
    %c0_11 = arith.constant 0 : index
    %c0_12 = arith.constant 0 : index
    %c0_13 = arith.constant 0 : index
    %17 = vector.load %arg5[%c0_10, %c0_11, %c0_12, %c0_13] : memref<1x4x8x128xf32, #tpu.memory_space<vmem>>, vector<1x1x8x128xf32>
    %18 = vector.shape_cast %17 : vector<1x1x8x128xf32> to vector<8x128xf32>
    %19 = arith.addf %18, %16 : vector<8x128xf32>
    %c0_14 = arith.constant 0 : index
    %c0_15 = arith.constant 0 : index
    %c0_16 = arith.constant 0 : index
    %c0_17 = arith.constant 0 : index
    %20 = vector.load %arg5[%c0_14, %c0_15, %c0_16, %c0_17] : memref<1x4x8x128xf32, #tpu.memory_space<vmem>>, vector<1x1x8x128xf32>
    %21 = vector.shape_cast %20 : vector<1x1x8x128xf32> to vector<8x128xf32>
    %22 = vector.shape_cast %19 : vector<8x128xf32> to vector<1x1x8x128xf32>
    tpu.vector_store %arg5[%c0_14, %c0_15, %c0_16, %c0_17], %22 {strides = array<i32>} : memref<1x4x8x128xf32, #tpu.memory_space<vmem>>, vector<1x1x8x128xf32>,
    %23 = vector.shape_cast %9 : vector<8x128xf32> to vector<1x8x128xf32>
    %cst_18 = arith.constant dense<0.000000e+00> : vector<8x128xf32>
    %24 = vector.multi_reduction <add>, %23, %cst_18 [0] : vector<1x8x128xf32> to vector<8x128xf32>
    %c0_19 = arith.constant 0 : index
    %c1 = arith.constant 1 : index
    %c0_20 = arith.constant 0 : index
    %c0_21 = arith.constant 0 : index
    %25 = vector.load %arg5[%c0_19, %c1, %c0_20, %c0_21] : memref<1x4x8x128xf32, #tpu.memory_space<vmem>>, vector<1x1x8x128xf32>
    %26 = vector.shape_cast %25 : vector<1x1x8x128xf32> to vector<8x128xf32>
    %27 = arith.addf %26, %24 : vector<8x128xf32>
    %c0_22 = arith.constant 0 : index
    %c1_23 = arith.constant 1 : index
    %c0_24 = arith.constant 0 : index
    %c0_25 = arith.constant 0 : index
    %28 = vector.load %arg5[%c0_22, %c1_23, %c0_24, %c0_25] : memref<1x4x8x128xf32, #tpu.memory_space<vmem>>, vector<1x1x8x128xf32>
    %29 = vector.shape_cast %28 : vector<1x1x8x128xf32> to vector<8x128xf32>
    %30 = vector.shape_cast %27 : vector<8x128xf32> to vector<1x1x8x128xf32>
    tpu.vector_store %arg5[%c0_22, %c1_23, %c0_24, %c0_25], %30 {strides = array<i32>} : memref<1x4x8x128xf32, #tpu.memory_space<vmem>>, vector<1x1x8x128xf32>,
    %31 = vector.shape_cast %11 : vector<8x128xf32> to vector<1x8x128xf32>
    %cst_26 = arith.constant dense<0.000000e+00> : vector<8x128xf32>
    %32 = vector.multi_reduction <add>, %31, %cst_26 [0] : vector<1x8x128xf32> to vector<8x128xf32>
    %c0_27 = arith.constant 0 : index
    %c2 = arith.constant 2 : index
    %c0_28 = arith.constant 0 : index
    %c0_29 = arith.constant 0 : index
    %33 = vector.load %arg5[%c0_27, %c2, %c0_28, %c0_29] : memref<1x4x8x128xf32, #tpu.memory_space<vmem>>, vector<1x1x8x128xf32>
    %34 = vector.shape_cast %33 : vector<1x1x8x128xf32> to vector<8x128xf32>
    %35 = arith.addf %34, %32 : vector<8x128xf32>
    %c0_30 = arith.constant 0 : index
    %c2_31 = arith.constant 2 : index
    %c0_32 = arith.constant 0 : index
    %c0_33 = arith.constant 0 : index
    %36 = vector.load %arg5[%c0_30, %c2_31, %c0_32, %c0_33] : memref<1x4x8x128xf32, #tpu.memory_space<vmem>>, vector<1x1x8x128xf32>
    %37 = vector.shape_cast %36 : vector<1x1x8x128xf32> to vector<8x128xf32>
    %38 = vector.shape_cast %35 : vector<8x128xf32> to vector<1x1x8x128xf32>
    tpu.vector_store %arg5[%c0_30, %c2_31, %c0_32, %c0_33], %38 {strides = array<i32>} : memref<1x4x8x128xf32, #tpu.memory_space<vmem>>, vector<1x1x8x128xf32>,
    %39 = vector.shape_cast %14 : vector<8x128xf32> to vector<1x8x128xf32>
    %cst_34 = arith.constant dense<0.000000e+00> : vector<8x128xf32>
    %40 = vector.multi_reduction <add>, %39, %cst_34 [0] : vector<1x8x128xf32> to vector<8x128xf32>
    %c0_35 = arith.constant 0 : index
    %c3 = arith.constant 3 : index
    %c0_36 = arith.constant 0 : index
    %c0_37 = arith.constant 0 : index
    %41 = vector.load %arg5[%c0_35, %c3, %c0_36, %c0_37] : memref<1x4x8x128xf32, #tpu.memory_space<vmem>>, vector<1x1x8x128xf32>
    %42 = vector.shape_cast %41 : vector<1x1x8x128xf32> to vector<8x128xf32>
    %43 = arith.addf %42, %40 : vector<8x128xf32>
    %c0_38 = arith.constant 0 : index
    %c3_39 = arith.constant 3 : index
    %c0_40 = arith.constant 0 : index
    %c0_41 = arith.constant 0 : index
    %44 = vector.load %arg5[%c0_38, %c3_39, %c0_40, %c0_41] : memref<1x4x8x128xf32, #tpu.memory_space<vmem>>, vector<1x1x8x128xf32>
    %45 = vector.shape_cast %44 : vector<1x1x8x128xf32> to vector<8x128xf32>
    %46 = vector.shape_cast %43 : vector<8x128xf32> to vector<1x1x8x128xf32>
    tpu.vector_store %arg5[%c0_38, %c3_39, %c0_40, %c0_41], %46 {strides = array<i32>} : memref<1x4x8x128xf32, #tpu.memory_space<vmem>>, vector<1x1x8x128xf32>,
    return
  }
  func.func @transform_0(%arg0: i32, %arg1: i32) -> (i32, i32, i32) {
    %c0_i32 = arith.constant 0 : i32
    %c0_i32_0 = arith.constant 0 : i32
    return %arg0, %arg1, %c0_i32 : i32, i32, i32
  }
  func.func @transform_1(%arg0: i32, %arg1: i32) -> (i32, i32, i32) {
    %c0_i32 = arith.constant 0 : i32
    %c0_i32_0 = arith.constant 0 : i32
    return %arg0, %arg1, %c0_i32 : i32, i32, i32
  }
  func.func @transform_2(%arg0: i32, %arg1: i32) -> (i32, i32, i32) {
    %c0_i32 = arith.constant 0 : i32
    %c0_i32_0 = arith.constant 0 : i32
    return %arg0, %arg1, %c0_i32 : i32, i32, i32
  }
  func.func @transform_3(%arg0: i32, %arg1: i32) -> (i32, i32, i32, i32) {
    %c0_i32 = arith.constant 0 : i32
    %c0_i32_0 = arith.constant 0 : i32
    %c0_i32_1 = arith.constant 0 : i32
    %c0_i32_2 = arith.constant 0 : i32
    return %arg0, %c0_i32, %c0_i32_0, %c0_i32_1 : i32, i32, i32, i32
  }
}

</mosaic_0001>

<llo_original>
// kernel: tpu_custom_call.1
$region0: #{tpu_custom_call.1}
  #allocation0 [shape = 'u32[]', space=smem, size = 0x4, offset = 0x4, fixed_abs, tag = 'smem constant byte address 0x4 - core index']
  #allocation1 [shape = 'u32[144,128]{1,0:T(1,128)}', space=vmem, size = 0x12000, scoped, tag = 'internal scratch']
  %s0 = inlined_call_operand.hbm [shape: f32[2,8,128], index: 0, kind: input, shape index: {}]
  %s1 = inlined_call_operand.hbm [shape: f32[2,8,128], index: 1, kind: input, shape index: {}]
  %s2 = inlined_call_operand.hbm [shape: f32[2,8,128], index: 2, kind: input, shape index: {}]
  %s3 = inlined_call_operand.hbm [shape: f32[2,4,8,128], index: 3, kind: output, shape index: {}]
  %s4 = sld [smem:[#allocation0]]
  $region61: #{tpu_custom_call.1} parent=0
    _
  %s6 = ssub.s32 1, %s4
  %s7 = scalar_select 0, %s6, %s4
  $region1: #{tpu_custom_call.1} parent=0
    #allocation2 [shape = 'u8[8192]{0}', space=vmem, size = 0x2000, scoped, tag = 'input window, operand 0']
    #allocation3 [shape = 's32[2]{0}', space=sflag, size = 0x8, scoped, tag = 'scoped memory for tpu_custom_call.1']
    #allocation4 [shape = 's32[2]{0}', space=sflag, size = 0x8, scoped, tag = 'scoped memory for tpu_custom_call.1']
    #allocation5 [shape = 'u8[8192]{0}', space=vmem, size = 0x2000, scoped, tag = 'input window, operand 1']
    #allocation6 [shape = 's32[2]{0}', space=sflag, size = 0x8, scoped, tag = 'scoped memory for tpu_custom_call.1']
    #allocation7 [shape = 'u8[8192]{0}', space=vmem, size = 0x2000, scoped, tag = 'input window, operand 2']
    #allocation8 [shape = 'u8[32768]{0}', space=vmem, size = 0x8000, scoped, tag = 'output window, operand 0']
    %8 = vsyncpa [#allocation3], 0
    %s9 = scalar_lea.sflag [#allocation3], 1
    %10 = vsyncpa %s9, 0
    %11 = vsyncpa [#allocation6], 0
    %s12 = scalar_lea.sflag [#allocation6], 1
    %13 = vsyncpa %s12, 0
    %14 = vsyncpa [#allocation4], 0
    %s15 = scalar_lea.sflag [#allocation4], 1
    %16 = vsyncpa %s15, 0
    loop: start=0, step=1, limit=4
    $region2: #{tpu_custom_call.1} parent=1 // loop_pre_header
      _
    $region3: #{tpu_custom_call.1} parent=1 // loop_header
      %s18 = sphi 0, %s22
      %p19 = scmp.ge.s32.totalorder %s18, 4
      %s25 = sphi 0, %s37
      %s26 = sphi 0, %s33
      %s27 = sphi 0, %s25
      %s28 = sphi 0, %s26
      %s29 = sphi 0, %s27
      %s30 = sphi 0, %s28
      %s42 = sphi 0, %s44
      %s45 = sphi 0, %s42
      %s46 = sphi 0, %s45
      %s62 = sphi 0, %s46
      %s70 = sphi 0, %s72
      %s73 = sphi 0, %s70
      %s74 = sphi 0, %s73
      %s90 = sphi 0, %s74
      %s98 = sphi 0, %s100
      %s101 = sphi 0, %s98
      %s102 = sphi 0, %s101
      %s118 = sphi 0, %s102
      %s124 = sphi 0, %s126
      %s127 = sphi 0, %s124
      %s128 = sphi 0, %s127
      %s144 = sphi 0, %s128
    $region4: #{tpu_custom_call.1} parent=1 // loop_header_branch
      %21 = sbr.rel (%p19) target = $region8
    $region5: #{tpu_custom_call.1} parent=1 // loop_body
      %s23 = ssub.s32 %s18, 1
      %s24 = ssub.s32 %s18, 2
      %s31 = sadd.s32 1, %s26
      %p32 = scmp.ge.s32.totalorder %s31, 1
      %s33 = scalar_select %p32, 0, %s31
      %s34 = sadd.s32 1, %s25
      %s35 = scalar_select %p32, %s34, %s25
      %p36 = scmp.ge.s32.totalorder %s35, 2
      %s37 = scalar_select %p36, 0, %s35
      %s38 = ssub.s32 %s25, %s37
      %s39 = ssub.s32 %s26, %s33
      %s40 = sor.u32 %s38, %s39
      %p41 = scmp.eq.s32.totalorder %s40, 0
      %s43 = sadd.s32 %s42, 1
      %s44 = scalar_select %p41, %s42, %s43
      %p47 = pneg %p41
      %p48 = scmp.eq.s32.totalorder %s18, 1
      %p49 = por %p47, %p48
      %p50 = scmp.ne.s32.totalorder %s42, %s45
      %p51 = scmp.eq.s32.totalorder %s18, 0
      %p52 = por %p50, %p51
      %p53 = scmp.ne.s32.totalorder %s42, %s45
      %p54 = scmp.eq.s32.totalorder %s23, 1
      %p55 = por %p53, %p54
      %p56 = scmp.ne.s32.totalorder %s45, %s46
      %p57 = scmp.eq.s32.totalorder %s23, 0
      %p58 = por %p56, %p57
      %p59 = scmp.ne.s32.totalorder %s45, %s46
      %p60 = scmp.eq.s32.totalorder %s24, 1
      %p61 = por %p59, %p60
      %p63 = scmp.ne.s32.totalorder %s46, %s62
      %p64 = scmp.eq.s32.totalorder %s24, 0
      %p65 = por %p63, %p64
      %s66 = ssub.s32 %s25, %s37
      %s67 = ssub.s32 %s26, %s33
      %s68 = sor.u32 %s66, %s67
      %p69 = scmp.eq.s32.totalorder %s68, 0
      %s71 = sadd.s32 %s70, 1
      %s72 = scalar_select %p69, %s70, %s71
      %p75 = pneg %p69
      %p76 = scmp.eq.s32.totalorder %s18, 1
      %p77 = por %p75, %p76
      %p78 = scmp.ne.s32.totalorder %s70, %s73
      %p79 = scmp.eq.s32.totalorder %s18, 0
      %p80 = por %p78, %p79
      %p81 = scmp.ne.s32.totalorder %s70, %s73
      %p82 = scmp.eq.s32.totalorder %s23, 1
      %p83 = por %p81, %p82
      %p84 = scmp.ne.s32.totalorder %s73, %s74
      %p85 = scmp.eq.s32.totalorder %s23, 0
      %p86 = por %p84, %p85
      %p87 = scmp.ne.s32.totalorder %s73, %s74
      %p88 = scmp.eq.s32.totalorder %s24, 1
      %p89 = por %p87, %p88
      %p91 = scmp.ne.s32.totalorder %s74, %s90
      %p92 = scmp.eq.s32.totalorder %s24, 0
      %p93 = por %p91, %p92
      %s94 = ssub.s32 %s25, %s37
      %s95 = ssub.s32 %s26, %s33
      %s96 = sor.u32 %s94, %s95
      %p97 = scmp.eq.s32.totalorder %s96, 0
      %s99 = sadd.s32 %s98, 1
      %s100 = scalar_select %p97, %s98, %s99
      %p103 = pneg %p97
      %p104 = scmp.eq.s32.totalorder %s18, 1
      %p105 = por %p103, %p104
      %p106 = scmp.ne.s32.totalorder %s98, %s101
      %p107 = scmp.eq.s32.totalorder %s18, 0
      %p108 = por %p106, %p107
      %p109 = scmp.ne.s32.totalorder %s98, %s101
      %p110 = scmp.eq.s32.totalorder %s23, 1
      %p111 = por %p109, %p110
      %p112 = scmp.ne.s32.totalorder %s101, %s102
      %p113 = scmp.eq.s32.totalorder %s23, 0
      %p114 = por %p112, %p113
      %p115 = scmp.ne.s32.totalorder %s101, %s102
      %p116 = scmp.eq.s32.totalorder %s24, 1
      %p117 = por %p115, %p116
      %p119 = scmp.ne.s32.totalorder %s102, %s118
      %p120 = scmp.eq.s32.totalorder %s24, 0
      %p121 = por %p119, %p120
      %s122 = ssub.s32 %s25, %s37
      %p123 = scmp.eq.s32.totalorder %s122, 0
      %s125 = sadd.s32 %s124, 1
      %s126 = scalar_select %p123, %s124, %s125
      %p129 = pneg %p123
      %p130 = scmp.eq.s32.totalorder %s18, 1
      %p131 = por %p129, %p130
      %p132 = scmp.ne.s32.totalorder %s124, %s127
      %p133 = scmp.eq.s32.totalorder %s18, 0
      %p134 = por %p132, %p133
      %p135 = scmp.ne.s32.totalorder %s124, %s127
      %p136 = scmp.eq.s32.totalorder %s23, 1
      %p137 = por %p135, %p136
      %p138 = scmp.ne.s32.totalorder %s127, %s128
      %p139 = scmp.eq.s32.totalorder %s23, 0
      %p140 = por %p138, %p139
      %p141 = scmp.ne.s32.totalorder %s127, %s128
      %p142 = scmp.eq.s32.totalorder %s24, 1
      %p143 = por %p141, %p142
      %p145 = scmp.ne.s32.totalorder %s128, %s144
      %p146 = scmp.eq.s32.totalorder %s24, 0
      %p147 = por %p145, %p146
      %p148 = scmp.le.s32.totalorder 1, %s18
      %p149 = scmp.lt.s32.totalorder %s18, 3
      %p150 = pnand %p148, %p149
      %p151 = pneg %p150
      // Predicated region
      $region9: #{tpu_custom_call.1} parent=5 // pred_check
        _
      $region10: #{tpu_custom_call.1} parent=5 // pred_check_branch
        %153 = sbr.rel (%p150) target = $region12
      $region11: #{tpu_custom_call.1} parent=5 // pred_region
        %s154 = ssub.s32 %s18, 1
      $region12: #{tpu_custom_call.1} parent=5 // pred_fallthru
        _
      %p155 = scmp.lt.s32.totalorder %s18, 2
      // Predicated region
      $region13: #{tpu_custom_call.1} parent=5 // pred_check
        %p156 = pneg %p155
      $region14: #{tpu_custom_call.1} parent=5 // pred_check_branch
        %158 = sbr.rel (%p156) target = $region16
      $region15: #{tpu_custom_call.1} parent=5 // pred_region
        // Predicated region
        $region17: #{tpu_custom_call.1} parent=15 // pred_check
          %p159 = pneg %p52
        $region18: #{tpu_custom_call.1} parent=15 // pred_check_branch
          %161 = sbr.rel (%p159) target = $region20
        $region19: #{tpu_custom_call.1} parent=15 // pred_region
          %s162 = sand.u32 %s42, 1
          %s163 = scalar_lea.sflag [#allocation3], %s162
          %s164 = sand.u32 %s42, 1
          %s165 = smul.addr %s164, 8
          %s166 = scalar_lea.vmem [#allocation2], %s165
          %s168 = ssub.s32 128, 128
          %169 = vsyncadd %s163, %s168
          %s170 = sadd.s32 %s26, %s25
          %s171 = smul.addr %s170, 128
          %s172 = scalar_lea.hbm %s0, %s171
          %s174 = sshll.u32 %s166, 4
          %s175 = int_to_ptr.vmem [resolvable:$true] %s174
          %177 = dma.hbm_to_vmem [thread:$0]  %s172, 128, %s175, %s163
        $region20: #{tpu_custom_call.1} parent=15 // pred_fallthru
          _
        // Predicated region
        $region21: #{tpu_custom_call.1} parent=15 // pred_check
          %p178 = pneg %p80
        $region22: #{tpu_custom_call.1} parent=15 // pred_check_branch
          %180 = sbr.rel (%p178) target = $region24
        $region23: #{tpu_custom_call.1} parent=15 // pred_region
          %s181 = sand.u32 %s18, 1
          %s182 = scalar_lea.sflag [#allocation6], %s181
          %s183 = sand.u32 %s70, 1
          %s184 = smul.addr %s183, 8
          %s185 = scalar_lea.vmem [#allocation5], %s184
          %s187 = ssub.s32 128, 128
          %188 = vsyncadd %s182, %s187
          %s189 = sadd.s32 %s26, %s25
          %s190 = smul.addr %s189, 128
          %s191 = scalar_lea.hbm %s1, %s190
          %s193 = sshll.u32 %s185, 4
          %s194 = int_to_ptr.vmem [resolvable:$true] %s193
          %196 = dma.hbm_to_vmem [thread:$0]  %s191, 128, %s194, %s182
        $region24: #{tpu_custom_call.1} parent=15 // pred_fallthru
          _
        // Predicated region
        $region25: #{tpu_custom_call.1} parent=15 // pred_check
          %p197 = pneg %p108
        $region26: #{tpu_custom_call.1} parent=15 // pred_check_branch
          %199 = sbr.rel (%p197) target = $region28
        $region27: #{tpu_custom_call.1} parent=15 // pred_region
          %s200 = sand.u32 %s18, 1
          %s201 = scalar_lea.sflag [#allocation6], %s200
          %s202 = sand.u32 %s98, 1
          %s203 = smul.addr %s202, 8
          %s204 = scalar_lea.vmem [#allocation7], %s203
          %s206 = ssub.s32 128, 128
          %207 = vsyncadd %s201, %s206
          %s208 = sadd.s32 %s26, %s25
          %s209 = smul.addr %s208, 128
          %s210 = scalar_lea.hbm %s2, %s209
          %s212 = sshll.u32 %s204, 4
          %s213 = int_to_ptr.vmem [resolvable:$true] %s212
          %215 = dma.hbm_to_vmem [thread:$0]  %s210, 128, %s213, %s201
        $region28: #{tpu_custom_call.1} parent=15 // pred_fallthru
          _
      $region16: #{tpu_custom_call.1} parent=5 // pred_fallthru
        _
      %p216 = scmp.le.s32.totalorder 1, %s18
      %p217 = scmp.lt.s32.totalorder %s18, 3
      %p218 = pnand %p216, %p217
      %p219 = pneg %p218
      // Predicated region
      $region29: #{tpu_custom_call.1} parent=5 // pred_check
        _
      $region30: #{tpu_custom_call.1} parent=5 // pred_check_branch
        %221 = sbr.rel (%p218) target = $region32
      $region31: #{tpu_custom_call.1} parent=5 // pred_region
        %s222 = ssub.s32 %s18, 1
        %s223 = sand.u32 %s45, 1
        %s224 = scalar_lea.sflag [#allocation3], %s223
        %s225 = sand.u32 %s45, 1
        %s226 = smul.addr %s225, 8
        %s227 = scalar_lea.vmem [#allocation2], %s226
        // Predicated region
        $region33: #{tpu_custom_call.1} parent=31 // pred_check
          %p228 = pneg %p58
        $region34: #{tpu_custom_call.1} parent=31 // pred_check_branch
          %230 = sbr.rel (%p228) target = $region36
        $region35: #{tpu_custom_call.1} parent=31 // pred_region
          %231 = dma.done %s224, 128
        $region36: #{tpu_custom_call.1} parent=31 // pred_fallthru
          _
        %s232 = sand.u32 %s23, 1
        %s233 = scalar_lea.sflag [#allocation6], %s232
        %s234 = sand.u32 %s73, 1
        %s235 = smul.addr %s234, 8
        %s236 = scalar_lea.vmem [#allocation5], %s235
        // Predicated region
        $region37: #{tpu_custom_call.1} parent=31 // pred_check
          %p237 = pneg %p86
        $region38: #{tpu_custom_call.1} parent=31 // pred_check_branch
          %239 = sbr.rel (%p237) target = $region40
        $region39: #{tpu_custom_call.1} parent=31 // pred_region
          %240 = dma.done %s233, 128
        $region40: #{tpu_custom_call.1} parent=31 // pred_fallthru
          _
        %s241 = sand.u32 %s23, 1
        %s242 = scalar_lea.sflag [#allocation6], %s241
        %s243 = sand.u32 %s101, 1
        %s244 = smul.addr %s243, 8
        %s245 = scalar_lea.vmem [#allocation7], %s244
        // Predicated region
        $region41: #{tpu_custom_call.1} parent=31 // pred_check
          %p246 = pneg %p114
        $region42: #{tpu_custom_call.1} parent=31 // pred_check_branch
          %248 = sbr.rel (%p246) target = $region44
        $region43: #{tpu_custom_call.1} parent=31 // pred_region
          %249 = dma.done %s242, 128
        $region44: #{tpu_custom_call.1} parent=31 // pred_fallthru
          _
        %s250 = sand.u32 %s45, 1
        %s251 = scalar_lea.sflag [#allocation3], %s250
        %s252 = sand.u32 %s45, 1
        %s253 = smul.addr %s252, 8
        %s254 = scalar_lea.vmem [#allocation2], %s253
        %p255 = pneg %p58
        %p256 = pneg %p55
        %s257 = sand.u32 %s23, 1
        %s258 = scalar_lea.sflag [#allocation6], %s257
        %s259 = sand.u32 %s73, 1
        %s260 = smul.addr %s259, 8
        %s261 = scalar_lea.vmem [#allocation5], %s260
        %p262 = pneg %p86
        %p263 = pneg %p83
        %s264 = sand.u32 %s23, 1
        %s265 = scalar_lea.sflag [#allocation6], %s264
        %s266 = sand.u32 %s101, 1
        %s267 = smul.addr %s266, 8
        %s268 = scalar_lea.vmem [#allocation7], %s267
        %p269 = pneg %p114
        %p270 = pneg %p111
        %p271 = pneg %p140
        %p272 = pneg %p137
        %s273 = sand.u32 %s127, 1
        %s274 = scalar_lea.sflag [#allocation4], %s273
        %s275 = sand.u32 %s127, 1
        %s276 = smul.addr %s275, 32
        %s277 = scalar_lea.vmem [#allocation8], %s276
        %p278 = scmp.eq.s32.totalorder %s28, 0
        // Predicated region
        $region45: #{tpu_custom_call.1} parent=31 // pred_check
          %p279 = pneg %p278
        $region46: #{tpu_custom_call.1} parent=31 // pred_check_branch
          %281 = sbr.rel (%p279) target = $region48
        $region47: #{tpu_custom_call.1} parent=31 // pred_region
          %282 = vst [vmem:[%s277] sm:$0xff] 0.0
          %283 = vst [vmem:[%s277 + $0x8] sm:$0xff] 0.0
          %284 = vst [vmem:[%s277 + $0x10] sm:$0xff] 0.0
          %285 = vst [vmem:[%s277 + $0x18] sm:$0xff] 0.0
        $region48: #{tpu_custom_call.1} parent=31 // pred_fallthru
          _
        %v286 = vld [vmem:[%s227] sm:$0xff]
        %v287 = vld [vmem:[%s236] sm:$0xff]
        %v288 = vld [vmem:[%s245] sm:$0xff]
        %v289 = vmul.f32 %v286, %v288
        %v290 = vmul.f32 %v289, %v287
        %v291 = vmul.f32 %v287, %v288
        %v292 = vsub.f32 1.0, %v288
        %v293 = vmul.f32 %v286, %v292
        %v294 = vadd.f32 %v290, 0.0
        %v295 = vld [vmem:[%s277] sm:$0xff]
        %v296 = vadd.f32 %v295, %v294
        %297 = vst [vmem:[%s277] sm:$0xff] %v296
        %v298 = vadd.f32 %v289, 0.0
        %s299 = scalar_lea.vmem %s277, 8 [#allocation8]
        %v300 = vld [vmem:[%s299] sm:$0xff]
        %v301 = vadd.f32 %v300, %v298
        %302 = vst [vmem:[%s299] sm:$0xff] %v301
        %v303 = vadd.f32 %v291, 0.0
        %s304 = scalar_lea.vmem %s277, 16 [#allocation8]
        %v305 = vld [vmem:[%s304] sm:$0xff]
        %v306 = vadd.f32 %v305, %v303
        %307 = vst [vmem:[%s304] sm:$0xff] %v306
        %v308 = vadd.f32 %v293, 0.0
        %s309 = scalar_lea.vmem %s277, 24 [#allocation8]
        %v310 = vld [vmem:[%s309] sm:$0xff]
        %v311 = vadd.f32 %v310, %v308
        %312 = vst [vmem:[%s309] sm:$0xff] %v311
        %s313 = sand.u32 %s127, 1
        %s314 = scalar_lea.sflag [#allocation4], %s313
        %s315 = sand.u32 %s127, 1
        %s316 = smul.addr %s315, 32
        %s317 = scalar_lea.vmem [#allocation8], %s316
        // Predicated region
        $region49: #{tpu_custom_call.1} parent=31 // pred_check
          %p318 = pneg %p137
        $region50: #{tpu_custom_call.1} parent=31 // pred_check_branch
          %320 = sbr.rel (%p318) target = $region52
        $region51: #{tpu_custom_call.1} parent=31 // pred_region
          %s322 = ssub.s32 512, 512
          %323 = vsyncadd %s314, %s322
          %s324 = smul.addr %s27, 4
          %s325 = smul.addr %s324, 128
          %s326 = scalar_lea.hbm %s3, %s325
          %s327 = sshll.u32 %s317, 4
          %s328 = int_to_ptr.vmem [resolvable:$true] %s327
          %333 = dma.vmem_to_hbm [thread:$0]  %s328, 512, %s326, %s314, 128, 128, 8
        $region52: #{tpu_custom_call.1} parent=31 // pred_fallthru
          _
      $region32: #{tpu_custom_call.1} parent=5 // pred_fallthru
        _
      %p334 = scmp.le.s32.totalorder 2, %s18
      // Predicated region
      $region53: #{tpu_custom_call.1} parent=5 // pred_check
        %p335 = pneg %p334
      $region54: #{tpu_custom_call.1} parent=5 // pred_check_branch
        %337 = sbr.rel (%p335) target = $region56
      $region55: #{tpu_custom_call.1} parent=5 // pred_region
        %s338 = ssub.s32 %s18, 2
        // Predicated region
        $region57: #{tpu_custom_call.1} parent=55 // pred_check
          %p339 = pneg %p143
        $region58: #{tpu_custom_call.1} parent=55 // pred_check_branch
          %341 = sbr.rel (%p339) target = $region60
        $region59: #{tpu_custom_call.1} parent=55 // pred_region
          %s342 = sand.u32 %s128, 1
          %s343 = scalar_lea.sflag [#allocation4], %s342
          %s344 = sand.u32 %s128, 1
          %s345 = smul.addr %s344, 32
          %s346 = scalar_lea.vmem [#allocation8], %s345
          %347 = dma.done %s343, 512
        $region60: #{tpu_custom_call.1} parent=55 // pred_fallthru
          _
      $region56: #{tpu_custom_call.1} parent=5 // pred_fallthru
        _
    $region6: #{tpu_custom_call.1} parent=1 // loop_footer
      %s22 = sadd.s32 1, %s18
    $region7: #{tpu_custom_call.1} parent=1 // loop_footer_branch
      %17 = sbr.rel target = $region3
    $region8: #{tpu_custom_call.1} parent=1 // loop_exit
      _
    %348 = vsyncpa [#allocation3], 1
    %s349 = scalar_lea.sflag [#allocation3], 1
    %350 = vsyncpa %s349, 1
    %351 = vsyncpa [#allocation6], 1
    %s352 = scalar_lea.sflag [#allocation6], 1
    %353 = vsyncpa %s352, 1
    %354 = vsyncpa [#allocation4], 1
    %s355 = scalar_lea.sflag [#allocation4], 1
    %356 = vsyncpa %s355, 1

</llo_original>
